<compile_context>
chip_gen: v6e
topology: v6e:2x2x1
jax: 0.10.0
libtpu: 0.0.40
codegen_flags: <defaults>
</compile_context>

<pallas_src>
import functools

import jax
import jax.numpy as jnp
from jax.experimental import pallas as pl
from jax.experimental.pallas import tpu as pltpu

_LANE = 128


def _sum_rows_kernel(x_ref, o_ref, *, ts, s_valid, mask_tail):
    """Accumulate per-lane partial sums of x (bt, ts, 128) into o (1, bt, 128)."""
    k = pl.program_id(1)

    @pl.when(k == 0)
    def _():
        o_ref[...] = jnp.zeros_like(o_ref)

    def _accumulate(x_f32):
        # Cheap sublane reduce per block; the single cross-lane reduce is
        # deferred to the (tiny) wrapper epilogue.
        o_ref[...] += jnp.sum(x_f32, axis=1)[None]

    if mask_tail:
        is_last = k == pl.num_programs(1) - 1

        @pl.when(jnp.logical_not(is_last))
        def _():
            _accumulate(x_ref[...].astype(jnp.float32))

        @pl.when(is_last)
        def _():
            # Only the final k block can run past the real row count; masking
            # only here keeps steady-state blocks pure unmasked adds.
            row = jax.lax.broadcasted_iota(jnp.int32, (1, ts, 1), 1) + k * ts
            x = jnp.where(row < s_valid, x_ref[...].astype(jnp.float32), 0.0)
            _accumulate(x)
    else:
        _accumulate(x_ref[...].astype(jnp.float32))


def ae_batch(estimated_density_map, gt_num, *, target_block_bytes=8 << 20):
    """estimated_density_map: (B, C, H, W); gt_num: (B,).

    Returns (B,) float32: abs(sum over (C,H,W) - gt_num).
    """
    B = estimated_density_map.shape[0]
    M = 1
    for d in estimated_density_map.shape[1:]:
        M *= d

    x = estimated_density_map
    # Keep narrow float dtypes native (halves HBM traffic); accumulate in f32
    # inside the kernel. Anything else (ints, f64) is cast up front.
    if x.dtype not in (jnp.dtype(jnp.float32), jnp.dtype(jnp.bfloat16)):
        x = x.astype(jnp.float32)
    gt = gt_num.astype(jnp.float32).reshape(B)

    x_flat = x.reshape(B, M)

    # Non-128-aligned tail: reduce the (< 128 elems/batch) tail with a tiny
    # JAX op instead of jnp.pad'ing a full extra HBM copy of the whole map.
    m_main = (M // _LANE) * _LANE
    if m_main == 0:
        x_main = jnp.pad(x_flat, ((0, 0), (0, _LANE - M)))  # tiny array only
        tail_sum = jnp.zeros((B,), jnp.float32)
        m_main = _LANE
    elif m_main < M:
        tail_sum = jnp.sum(x_flat[:, m_main:].astype(jnp.float32), axis=1)
        x_main = x_flat[:, :m_main]
    else:
        tail_sum = jnp.zeros((B,), jnp.float32)
        x_main = x_flat

    S = m_main // _LANE
    x3 = x_main.reshape(B, S, _LANE)

    dsize = x3.dtype.itemsize
    row_bytes = _LANE * dsize
    sub_align = 8 * (4 // dsize)  # (8,128) tiles for f32, (16,128) for bf16

    # v7x has 2 TensorCores: with a single big batch the "parallel" batch axis
    # would leave one idle, so split the reduction into 2 pseudo-batches
    # (free contiguous reshape) and combine in the wrapper.
    b_eff, s_eff = B, S
    if B == 1 and S % 2 == 0 and S * row_bytes > target_block_bytes:
        b_eff, s_eff = 2, S // 2
        x3 = x3.reshape(b_eff, s_eff, _LANE)

    per_batch_bytes = s_eff * row_bytes
    if per_batch_bytes <= target_block_bytes:
        # Small per-batch data: block over the batch dim so DMAs stay multi-MiB.
        ts = s_eff
        bt = max(1, min(b_eff, target_block_bytes // max(per_batch_bytes, 1)))
        mask_tail = False
    else:
        bt = 1
        ts = (target_block_bytes // row_bytes) // sub_align * sub_align
        ts = min(s_eff, max(sub_align, ts))
        mask_tail = (s_eff % ts) != 0

    grid_b = (b_eff + bt - 1) // bt
    grid_s = (s_eff + ts - 1) // ts

    kernel = functools.partial(
        _sum_rows_kernel, ts=ts, s_valid=s_eff, mask_tail=mask_tail)

    out = pl.pallas_call(
        kernel,
        out_shape=jax.ShapeDtypeStruct((grid_b, bt, _LANE), jnp.float32),
        grid_spec=pltpu.PrefetchScalarGridSpec(
            num_scalar_prefetch=0,
            grid=(grid_b, grid_s),
            in_specs=[
                # One contiguous bt*ts*128*dsize-byte DMA per grid step.
                pl.BlockSpec((bt, ts, _LANE), lambda bi, k: (bi, k, 0)),
            ],
            # Lane-dense output block, resident across the reduction axis.
            out_specs=pl.BlockSpec((1, bt, _LANE), lambda bi, k: (bi, 0, 0)),
        ),
        compiler_params=pltpu.CompilerParams(
            dimension_semantics=("parallel", "arbitrary"),
            vmem_limit_bytes=min(48 << 20,
                                 max(32 << 20, 3 * target_block_bytes))),
        cost_estimate=pl.CostEstimate(
            flops=b_eff * s_eff * _LANE,
            transcendentals=0,
            bytes_accessed=b_eff * s_eff * _LANE * dsize
            + grid_b * bt * _LANE * 4),
    )(x3)

    # Tiny epilogue on (B_eff, 128): cross-lane (+split) reduce, add tail,
    # abs(. - gt). Negligible vs the streaming reduction above.
    per_lane = out.reshape(grid_b * bt, _LANE)[:b_eff]
    total = jnp.sum(per_lane.reshape(B, -1), axis=1) + tail_sum
    return jnp.abs(total - gt)


if __name__ == "__main__":
    key = jax.random.PRNGKey(0)
    k1, k2, k3, k4 = jax.random.split(key, 4)

    # Primary case: 128-aligned C*H*W, small batch.
    B, C, H, W = 2, 4, 16, 16
    density = jax.random.uniform(k1, (B, C, H, W), dtype=jnp.float32)
    gt_num = jax.random.uniform(k2, (B,), dtype=jnp.float32) * 100.0
    out = jax.block_until_ready(ae_batch(density, gt_num))
    ref = jnp.abs(jnp.sum(density, axis=(1, 2, 3)) - gt_num)
    assert out.shape == (B,)
    assert jnp.allclose(out, ref, rtol=1e-5, atol=1e-5)

    # Secondary case: non-128-aligned C*H*W exercises the wrapper tail path.
    B2, C2, H2, W2 = 2, 4, 15, 15
    density2 = jax.random.uniform(k3, (B2, C2, H2, W2), dtype=jnp.float32)
    gt_num2 = jax.random.uniform(k4, (B2,), dtype=jnp.float32) * 100.0
    out2 = jax.block_until_ready(ae_batch(density2, gt_num2))
    ref2 = jnp.abs(jnp.sum(density2, axis=(1, 2, 3)) - gt_num2)
    assert out2.shape == (B2,)
    assert jnp.allclose(out2, ref2, rtol=1e-5, atol=1e-5)

    print("KERNEL_OK")
</pallas_src>

<mosaic_0001>
module attributes {stable_mosaic.version = 11 : i64} {
  func.func @_sum_rows_kernel(%arg0: i32, %arg1: i32, %arg2: memref<2x8x128xf32, #tpu.memory_space<vmem>>, %arg3: memref<1x2x128xf32, #tpu.memory_space<vmem>>) attributes {dimension_semantics = [#tpu.dimension_semantics<parallel>, #tpu.dimension_semantics<arbitrary>], iteration_bounds = array<i64: 1, 1>, scalar_prefetch = 0 : i64, scratch_operands = 0 : i64, tpu.core_type = #tpu.core_type<tc>, window_params = [{transform_indices = @transform_0, window_bounds = array<i64: 2, 8, 128>}, {transform_indices = @transform_1, window_bounds = array<i64: 1, 2, 128>}]} {
    %c0_i32 = arith.constant 0 : i32
    %0 = arith.cmpi eq, %arg1, %c0_i32 : i32
    %1 = arith.extui %0 : i1 to i32
    %c0_i32_0 = arith.constant 0 : i32
    %2 = arith.cmpi ne, %1, %c0_i32_0 : i32
    scf.if %2 {
      %cst_9 = arith.constant 0.000000e+00 : f32
      %9 = vector.broadcast %cst_9 : f32 to vector<1x2x128xf32>
      %c0_10 = arith.constant 0 : index
      %c0_11 = arith.constant 0 : index
      %c0_12 = arith.constant 0 : index
      %10 = vector.load %arg3[%c0_10, %c0_11, %c0_12] : memref<1x2x128xf32, #tpu.memory_space<vmem>>, vector<1x2x128xf32>
      tpu.vector_store %arg3[%c0_10, %c0_11, %c0_12], %9 {strides = array<i32>} : memref<1x2x128xf32, #tpu.memory_space<vmem>>, vector<1x2x128xf32>,
    } else {
    }
    %c0 = arith.constant 0 : index
    %c0_1 = arith.constant 0 : index
    %c0_2 = arith.constant 0 : index
    %3 = vector.load %arg2[%c0, %c0_1, %c0_2] : memref<2x8x128xf32, #tpu.memory_space<vmem>>, vector<2x8x128xf32>
    %c0_3 = arith.constant 0 : index
    %c0_4 = arith.constant 0 : index
    %c0_5 = arith.constant 0 : index
    %4 = vector.load %arg3[%c0_3, %c0_4, %c0_5] : memref<1x2x128xf32, #tpu.memory_space<vmem>>, vector<1x2x128xf32>
    %cst = arith.constant dense<0.000000e+00> : vector<2x128xf32>
    %5 = vector.multi_reduction <add>, %3, %cst [1] : vector<2x8x128xf32> to vector<2x128xf32>
    %6 = vector.shape_cast %5 : vector<2x128xf32> to vector<1x2x128xf32>
    %7 = arith.addf %4, %6 : vector<1x2x128xf32>
    %c0_6 = arith.constant 0 : index
    %c0_7 = arith.constant 0 : index
    %c0_8 = arith.constant 0 : index
    %8 = vector.load %arg3[%c0_6, %c0_7, %c0_8] : memref<1x2x128xf32, #tpu.memory_space<vmem>>, vector<1x2x128xf32>
    tpu.vector_store %arg3[%c0_6, %c0_7, %c0_8], %7 {strides = array<i32>} : memref<1x2x128xf32, #tpu.memory_space<vmem>>, vector<1x2x128xf32>,
    return
  }
  func.func @transform_0(%arg0: i32, %arg1: i32) -> (i32, i32, i32) {
    %c0_i32 = arith.constant 0 : i32
    %c0_i32_0 = arith.constant 0 : i32
    return %arg0, %arg1, %c0_i32 : i32, i32, i32
  }
  func.func @transform_1(%arg0: i32, %arg1: i32) -> (i32, i32, i32) {
    %c0_i32 = arith.constant 0 : i32
    %c0_i32_0 = arith.constant 0 : i32
    %c0_i32_1 = arith.constant 0 : i32
    return %arg0, %c0_i32, %c0_i32_0 : i32, i32, i32
  }
}

</mosaic_0001>

<llo_original>
// kernel: tpu_custom_call.1
$region0: #{tpu_custom_call.1}
  #allocation0 [shape = 'u32[]', space=smem, size = 0x4, offset = 0x4, fixed_abs, tag = 'smem constant byte address 0x4 - core index']
  #allocation1 [shape = 'u32[144,128]{1,0:T(1,128)}', space=vmem, size = 0x12000, scoped, tag = 'internal scratch']
  %s0 = inlined_call_operand.hbm [shape: f32[2,8,128], index: 0, kind: input, shape index: {}]
  %s1 = inlined_call_operand.hbm [shape: f32[1,2,128], index: 1, kind: output, shape index: {}]
  %s2 = sld [smem:[#allocation0]]
  $region22: #{tpu_custom_call.1} parent=0
    _
  %s4 = ssub.s32 1, %s2
  %s5 = scalar_select 0, %s4, %s2
  $region1: #{tpu_custom_call.1} parent=0
    #allocation2 [shape = 'u8[8192]{0}', space=vmem, size = 0x2000, scoped, tag = 'input window, operand 0, single buffered']
    #allocation3 [shape = 's32[1]{0}', space=sflag, size = 0x4, scoped, tag = 'scoped memory for tpu_custom_call.1']
    #allocation4 [shape = 's32[1]{0}', space=sflag, size = 0x4, scoped, tag = 'scoped memory for tpu_custom_call.1']
    #allocation5 [shape = 'u8[1024]{0}', space=vmem, size = 0x400, scoped, tag = 'output window, operand 0, single buffered']
    %6 = vsyncpa [#allocation3], 0
    %7 = vsyncpa [#allocation4], 0
    // Predicated region
    $region2: #{tpu_custom_call.1} parent=1 // pred_check
      _
    $region3: #{tpu_custom_call.1} parent=1 // pred_check_branch
      %9 = sbr.rel (0) target = $region5
    $region4: #{tpu_custom_call.1} parent=1 // pred_region
      %s11 = ssub.s32 256, 256
      %12 = vsyncadd [#allocation3], %s11
      %s13 = sshll.u32 [#allocation2], 4
      %s14 = int_to_ptr.vmem [resolvable:$true] %s13
      %19 = dma.hbm_to_vmem [thread:$0]  %s0, 256, %s14, [#allocation3], 128, 128, 8
    $region5: #{tpu_custom_call.1} parent=1 // pred_fallthru
      _
    // Predicated region
    $region6: #{tpu_custom_call.1} parent=1 // pred_check
      _
    $region7: #{tpu_custom_call.1} parent=1 // pred_check_branch
      %21 = sbr.rel (0) target = $region9
    $region8: #{tpu_custom_call.1} parent=1 // pred_region
      %22 = dma.done [#allocation3], 256
    $region9: #{tpu_custom_call.1} parent=1 // pred_fallthru
      _
    %p23 = scmp.eq.s32.totalorder 0, 0
    // Predicated region
    $region10: #{tpu_custom_call.1} parent=1 // pred_check
      %p24 = pneg %p23
    $region11: #{tpu_custom_call.1} parent=1 // pred_check_branch
      %26 = sbr.rel (%p24) target = $region13
    $region12: #{tpu_custom_call.1} parent=1 // pred_region
      %27 = vst [vmem:[#allocation5] sm:$0x3] 0.0
    $region13: #{tpu_custom_call.1} parent=1 // pred_fallthru
      _
    %v28 = vld [vmem:[#allocation2] sm:$0xff]
    %v29 = vld [vmem:[#allocation2 + $0x8] sm:$0xff]
    %v30 = vld [vmem:[#allocation5] sm:$0x3]
    %v31 = vrot.slane %v28, 4
    %v32 = vadd.f32 %v28, %v31
    %v33 = vrot.slane %v32, 2
    %v34 = vadd.f32 %v32, %v33
    %v35 = vrot.slane %v34, 1
    %v36 = vadd.f32 %v34, %v35
    %v37 = vrot.slane %v29, 4
    %v38 = vadd.f32 %v29, %v37
    %v39 = vrot.slane %v38, 2
    %v40 = vadd.f32 %v38, %v39
    %v41 = vrot.slane %v40, 1
    %v42 = vadd.f32 %v40, %v41
    %vm45 = vcmask 1041409
    %v46 = vsel %vm45, %v42, %v36
    %v48 = vadd.f32 %v30, %v46
    %49 = vst [vmem:[#allocation5] sm:$0x3] %v48
    // Predicated region
    $region14: #{tpu_custom_call.1} parent=1 // pred_check
      _
    $region15: #{tpu_custom_call.1} parent=1 // pred_check_branch
      %51 = sbr.rel (0) target = $region17
    $region16: #{tpu_custom_call.1} parent=1 // pred_region
      %s53 = ssub.s32 32, 32
      %54 = vsyncadd [#allocation4], %s53
      %s56 = sshll.u32 [#allocation5], 4
      %s57 = int_to_ptr.vmem [resolvable:$true] %s56
      %59 = dma.vmem_to_hbm [thread:$0]  %s57, 32, %s1, [#allocation4]
    $region17: #{tpu_custom_call.1} parent=1 // pred_fallthru
      _
    // Predicated region
    $region18: #{tpu_custom_call.1} parent=1 // pred_check
      _
    $region19: #{tpu_custom_call.1} parent=1 // pred_check_branch
      %61 = sbr.rel (0) target = $region21
    $region20: #{tpu_custom_call.1} parent=1 // pred_region
      %62 = dma.done [#allocation4], 32
    $region21: #{tpu_custom_call.1} parent=1 // pred_fallthru
      _
    %63 = vsyncpa [#allocation3], 1
    %64 = vsyncpa [#allocation4], 1

</llo_original>
